<compile_context>
chip_gen: v5e
topology: v5e:2x2
jax: 0.10.0
libtpu: 0.0.40
codegen_flags: <defaults>
</compile_context>

<pallas_src>
import jax
import jax.numpy as jnp
from jax.experimental import pallas as pl
from jax.experimental.pallas import tpu as pltpu

F = 128           # padded hidden-feature width (lane dim)
MAX_TB = 1024     # max batch tile (sublane dim); 1024x128 f32 h ~= 512 KiB VMEM


def _mlp_kernel(x_ref, w1r_ref, b1_ref, w2_ref, b2_ref, w3_ref, b3_ref,
                w4r_ref, b4_ref, o_ref):
    x = x_ref[...]                                                # (TB, 1)
    # Layer 1 (1 -> 32): input is a single feature, so this is a rank-1
    # broadcast on the VPU instead of a 128x-padded MXU matmul.
    h = jnp.maximum(x * w1r_ref[...] + b1_ref[...], 0.0)          # (TB, F)
    # Layers 2 & 3 (32 -> 32 -> 16), zero-padded to 128x128: MXU.
    h = jnp.maximum(
        jnp.dot(h, w2_ref[...], preferred_element_type=jnp.float32)
        + b2_ref[...], 0.0)
    h = jnp.maximum(
        jnp.dot(h, w3_ref[...], preferred_element_type=jnp.float32)
        + b3_ref[...], 0.0)
    # Layer 4 (16 -> 1): VPU multiply by the (1, F) weight row + lane reduce.
    o_ref[...] = (jnp.sum(h * w4r_ref[...], axis=-1, keepdims=True)
                  + b4_ref[...])                                  # (TB, 1)


def _round_up(n, m):
    return ((n + m - 1) // m) * m


def _choose_tile(batch):
    """Pick (TB, padded_batch). TB multiple of 8; >=2 grid steps when possible."""
    bp8 = _round_up(max(batch, 1), 8)
    if bp8 >= 2 * MAX_TB:
        tb = MAX_TB
    elif bp8 >= 16:
        # Split into (at least) two grid steps so v7x megacore uses both TCs.
        tb = _round_up(pl.cdiv(bp8, 2), 8)
    else:
        tb = bp8
    return tb, _round_up(bp8, tb)


def _pad2(a, rows, cols):
    out = jnp.zeros((rows, cols), dtype=jnp.float32)
    return out.at[: a.shape[0], : a.shape[1]].set(a.astype(jnp.float32))


def prepare_params(params):
    """Pad the tiny torch-layout weights to TPU-friendly shapes ONCE.

    params: [(W[in,out], b[out])] for layers (1->32), (32->32), (32->16), (16->1).
    Returns (w1_row[1,F], b1[1,F], w2[F,F], b2[1,F], w3[F,F], b3[1,F],
             w4_row[1,F], b4[1,1]).
    """
    (w1, b1), (w2, b2), (w3, b3), (w4, b4) = params
    return (
        _pad2(w1.reshape(1, -1), 1, F),       # (1, 32)  -> (1, F)
        _pad2(b1[None, :], 1, F),
        _pad2(w2, F, F),                      # (32, 32) -> (F, F)
        _pad2(b2[None, :], 1, F),
        _pad2(w3, F, F),                      # (32, 16) -> (F, F)
        _pad2(b3[None, :], 1, F),
        _pad2(w4.reshape(-1, 1).T, 1, F),     # (16, 1)  -> (1, F)
        jnp.asarray(b4, jnp.float32).reshape(1, 1),
    )


@jax.jit
def drag_mlp_forward(x, padded_params):
    """x: [B, 1] float32. padded_params: output of prepare_params()."""
    w1r, b1, w2, b2, w3, b3, w4r, b4 = padded_params
    B = x.shape[0]
    TB, Bp = _choose_tile(B)
    x = x.astype(jnp.float32)
    if Bp != B:
        x = jnp.pad(x, ((0, Bp - B), (0, 0)))   # 1 lane wide -> cheap

    const2d = lambda i: (0, 0)
    in_specs = [
        pl.BlockSpec((TB, 1), lambda i: (i, 0)),   # x column
        pl.BlockSpec((1, F), const2d),             # w1 row
        pl.BlockSpec((1, F), const2d),             # b1
        pl.BlockSpec((F, F), const2d),             # w2
        pl.BlockSpec((1, F), const2d),             # b2
        pl.BlockSpec((F, F), const2d),             # w3
        pl.BlockSpec((1, F), const2d),             # b3
        pl.BlockSpec((1, F), const2d),             # w4 row
        pl.BlockSpec((1, 1), const2d),             # b4 scalar
    ]
    out_spec = pl.BlockSpec((TB, 1), lambda i: (i, 0))

    out_p = pl.pallas_call(
        _mlp_kernel,
        out_shape=jax.ShapeDtypeStruct((Bp, 1), jnp.float32),
        grid_spec=pltpu.PrefetchScalarGridSpec(
            num_scalar_prefetch=0,
            grid=(Bp // TB,),
            in_specs=in_specs,
            out_specs=out_spec,
        ),
        compiler_params=pltpu.CompilerParams(
            dimension_semantics=("parallel",)),
    )(x, w1r, b1, w2, b2, w3, b3, w4r, b4)

    return out_p[:B]


def init_params(key, input_size=1, hidden_sizes=(32, 32, 16), output_size=1):
    """Deterministic nn.Linear-style init: U(-1/sqrt(fan_in), 1/sqrt(fan_in))."""
    sizes = [input_size, *hidden_sizes, output_size]
    params = []
    for i in range(len(sizes) - 1):
        fan_in, fan_out = sizes[i], sizes[i + 1]
        key, kw, kb = jax.random.split(key, 3)
        bound = 1.0 / jnp.sqrt(jnp.float32(fan_in))
        w = jax.random.uniform(kw, (fan_in, fan_out), jnp.float32, -bound, bound)
        b = jax.random.uniform(kb, (fan_out,), jnp.float32, -bound, bound)
        params.append((w, b))
    return params


def reference_forward(x, params):
    h = x
    for i, (w, b) in enumerate(params):
        h = h @ w + b
        if i < len(params) - 1:
            h = jnp.maximum(h, 0.0)
    return h


if __name__ == "__main__":
    key = jax.random.PRNGKey(0)
    kx, kx2, kp = jax.random.split(key, 3)

    params = init_params(kp)
    padded = prepare_params(params)   # pad weights once, reuse across calls

    # Small batch (single grid step).
    B, input_size = 8, 1
    x = jax.random.uniform(kx, (B, input_size), jnp.float32, 0.0, 10.0)
    out = jax.block_until_ready(drag_mlp_forward(x, padded))
    ref = reference_forward(x, params)
    assert out.shape == (B, 1)
    assert jnp.allclose(out, ref, atol=1e-5, rtol=1e-5), (out, ref)

    # Ragged batch (exercises batch padding + 2-step "parallel" grid).
    B2 = 37
    x2 = jax.random.uniform(kx2, (B2, input_size), jnp.float32, 0.0, 10.0)
    out2 = jax.block_until_ready(drag_mlp_forward(x2, padded))
    ref2 = reference_forward(x2, params)
    assert out2.shape == (B2, 1)
    assert jnp.allclose(out2, ref2, atol=1e-5, rtol=1e-5), (out2, ref2)

    print("KERNEL_OK")
</pallas_src>

<mosaic_0001>
module attributes {stable_mosaic.version = 11 : i64} {
  func.func @_mlp_kernel(%arg0: i32, %arg1: memref<8x1xf32, #tpu.memory_space<vmem>>, %arg2: memref<1x128xf32, #tpu.memory_space<vmem>>, %arg3: memref<1x128xf32, #tpu.memory_space<vmem>>, %arg4: memref<128x128xf32, #tpu.memory_space<vmem>>, %arg5: memref<1x128xf32, #tpu.memory_space<vmem>>, %arg6: memref<128x128xf32, #tpu.memory_space<vmem>>, %arg7: memref<1x128xf32, #tpu.memory_space<vmem>>, %arg8: memref<1x128xf32, #tpu.memory_space<vmem>>, %arg9: memref<1x1xf32, #tpu.memory_space<vmem>>, %arg10: memref<8x1xf32, #tpu.memory_space<vmem>>) attributes {dimension_semantics = [#tpu.dimension_semantics<parallel>], iteration_bounds = array<i64: 1>, scalar_prefetch = 0 : i64, scratch_operands = 0 : i64, tpu.core_type = #tpu.core_type<tc>, window_params = [{transform_indices = @transform_0, window_bounds = array<i64: 8, 1>}, {pipeline_mode = #tpu.pipeline_mode<synchronous>, transform_indices = @transform_1, window_bounds = array<i64: 1, 128>}, {pipeline_mode = #tpu.pipeline_mode<synchronous>, transform_indices = @transform_2, window_bounds = array<i64: 1, 128>}, {pipeline_mode = #tpu.pipeline_mode<synchronous>, transform_indices = @transform_3, window_bounds = array<i64: 128, 128>}, {pipeline_mode = #tpu.pipeline_mode<synchronous>, transform_indices = @transform_4, window_bounds = array<i64: 1, 128>}, {pipeline_mode = #tpu.pipeline_mode<synchronous>, transform_indices = @transform_5, window_bounds = array<i64: 128, 128>}, {pipeline_mode = #tpu.pipeline_mode<synchronous>, transform_indices = @transform_6, window_bounds = array<i64: 1, 128>}, {pipeline_mode = #tpu.pipeline_mode<synchronous>, transform_indices = @transform_7, window_bounds = array<i64: 1, 128>}, {pipeline_mode = #tpu.pipeline_mode<synchronous>, transform_indices = @transform_8, window_bounds = array<i64: 1, 1>}, {transform_indices = @transform_9, window_bounds = array<i64: 8, 1>}]} {
    %c0 = arith.constant 0 : index
    %c0_0 = arith.constant 0 : index
    %0 = vector.load %arg1[%c0, %c0_0] : memref<8x1xf32, #tpu.memory_space<vmem>>, vector<8x1xf32>
    %c0_1 = arith.constant 0 : index
    %c0_2 = arith.constant 0 : index
    %1 = vector.load %arg2[%c0_1, %c0_2] : memref<1x128xf32, #tpu.memory_space<vmem>>, vector<1x128xf32>
    %2 = vector.broadcast %0 : vector<8x1xf32> to vector<8x128xf32>
    %3 = vector.broadcast %1 : vector<1x128xf32> to vector<8x128xf32>
    %4 = arith.mulf %2, %3 : vector<8x128xf32>
    %c0_3 = arith.constant 0 : index
    %c0_4 = arith.constant 0 : index
    %5 = vector.load %arg3[%c0_3, %c0_4] : memref<1x128xf32, #tpu.memory_space<vmem>>, vector<1x128xf32>
    %6 = vector.broadcast %5 : vector<1x128xf32> to vector<8x128xf32>
    %7 = arith.addf %4, %6 : vector<8x128xf32>
    %cst = arith.constant 0.000000e+00 : f32
    %8 = vector.broadcast %cst : f32 to vector<8x128xf32>
    %9 = arith.maximumf %7, %8 : vector<8x128xf32>
    %c0_5 = arith.constant 0 : index
    %c0_6 = arith.constant 0 : index
    %10 = vector.load %arg4[%c0_5, %c0_6] : memref<128x128xf32, #tpu.memory_space<vmem>>, vector<128x128xf32>
    %cst_7 = arith.constant dense<0.000000e+00> : vector<8x128xf32>
    %11 = tpu.matmul %9, %10, %cst_7 {dimension_numbers = #tpu.dot_dimension_numbers<[1], [0], [0], [1], [0, 0, 1, 1], [], []>} : vector<8x128xf32>, vector<128x128xf32>, vector<8x128xf32> -> vector<8x128xf32>
    %c0_8 = arith.constant 0 : index
    %c0_9 = arith.constant 0 : index
    %12 = vector.load %arg5[%c0_8, %c0_9] : memref<1x128xf32, #tpu.memory_space<vmem>>, vector<1x128xf32>
    %13 = vector.broadcast %12 : vector<1x128xf32> to vector<8x128xf32>
    %14 = arith.addf %11, %13 : vector<8x128xf32>
    %cst_10 = arith.constant 0.000000e+00 : f32
    %15 = vector.broadcast %cst_10 : f32 to vector<8x128xf32>
    %16 = arith.maximumf %14, %15 : vector<8x128xf32>
    %c0_11 = arith.constant 0 : index
    %c0_12 = arith.constant 0 : index
    %17 = vector.load %arg6[%c0_11, %c0_12] : memref<128x128xf32, #tpu.memory_space<vmem>>, vector<128x128xf32>
    %cst_13 = arith.constant dense<0.000000e+00> : vector<8x128xf32>
    %18 = tpu.matmul %16, %17, %cst_13 {dimension_numbers = #tpu.dot_dimension_numbers<[1], [0], [0], [1], [0, 0, 1, 1], [], []>} : vector<8x128xf32>, vector<128x128xf32>, vector<8x128xf32> -> vector<8x128xf32>
    %c0_14 = arith.constant 0 : index
    %c0_15 = arith.constant 0 : index
    %19 = vector.load %arg7[%c0_14, %c0_15] : memref<1x128xf32, #tpu.memory_space<vmem>>, vector<1x128xf32>
    %20 = vector.broadcast %19 : vector<1x128xf32> to vector<8x128xf32>
    %21 = arith.addf %18, %20 : vector<8x128xf32>
    %cst_16 = arith.constant 0.000000e+00 : f32
    %22 = vector.broadcast %cst_16 : f32 to vector<8x128xf32>
    %23 = arith.maximumf %21, %22 : vector<8x128xf32>
    %c0_17 = arith.constant 0 : index
    %c0_18 = arith.constant 0 : index
    %24 = vector.load %arg8[%c0_17, %c0_18] : memref<1x128xf32, #tpu.memory_space<vmem>>, vector<1x128xf32>
    %25 = vector.broadcast %24 : vector<1x128xf32> to vector<8x128xf32>
    %26 = arith.mulf %23, %25 : vector<8x128xf32>
    %cst_19 = arith.constant dense<0.000000e+00> : vector<8xf32>
    %27 = vector.multi_reduction <add>, %26, %cst_19 [1] : vector<8x128xf32> to vector<8xf32>
    %28 = vector.shape_cast %27 : vector<8xf32> to vector<8x1xf32>
    %c0_20 = arith.constant 0 : index
    %c0_21 = arith.constant 0 : index
    %29 = vector.load %arg9[%c0_20, %c0_21] : memref<1x1xf32, #tpu.memory_space<vmem>>, vector<1x1xf32>
    %30 = vector.broadcast %29 : vector<1x1xf32> to vector<8x1xf32>
    %31 = arith.addf %28, %30 : vector<8x1xf32>
    %c0_22 = arith.constant 0 : index
    %c0_23 = arith.constant 0 : index
    %32 = vector.load %arg10[%c0_22, %c0_23] : memref<8x1xf32, #tpu.memory_space<vmem>>, vector<8x1xf32>
    tpu.vector_store %arg10[%c0_22, %c0_23], %31 {strides = array<i32>} : memref<8x1xf32, #tpu.memory_space<vmem>>, vector<8x1xf32>,
    return
  }
  func.func @transform_0(%arg0: i32) -> (i32, i32) {
    %c0_i32 = arith.constant 0 : i32
    %c0_i32_0 = arith.constant 0 : i32
    return %arg0, %c0_i32 : i32, i32
  }
  func.func @transform_1(%arg0: i32) -> (i32, i32) {
    %c0_i32 = arith.constant 0 : i32
    %c0_i32_0 = arith.constant 0 : i32
    %c0_i32_1 = arith.constant 0 : i32
    return %c0_i32, %c0_i32_0 : i32, i32
  }
  func.func @transform_2(%arg0: i32) -> (i32, i32) {
    %c0_i32 = arith.constant 0 : i32
    %c0_i32_0 = arith.constant 0 : i32
    %c0_i32_1 = arith.constant 0 : i32
    return %c0_i32, %c0_i32_0 : i32, i32
  }
  func.func @transform_3(%arg0: i32) -> (i32, i32) {
    %c0_i32 = arith.constant 0 : i32
    %c0_i32_0 = arith.constant 0 : i32
    %c0_i32_1 = arith.constant 0 : i32
    return %c0_i32, %c0_i32_0 : i32, i32
  }
  func.func @transform_4(%arg0: i32) -> (i32, i32) {
    %c0_i32 = arith.constant 0 : i32
    %c0_i32_0 = arith.constant 0 : i32
    %c0_i32_1 = arith.constant 0 : i32
    return %c0_i32, %c0_i32_0 : i32, i32
  }
  func.func @transform_5(%arg0: i32) -> (i32, i32) {
    %c0_i32 = arith.constant 0 : i32
    %c0_i32_0 = arith.constant 0 : i32
    %c0_i32_1 = arith.constant 0 : i32
    return %c0_i32, %c0_i32_0 : i32, i32
  }
  func.func @transform_6(%arg0: i32) -> (i32, i32) {
    %c0_i32 = arith.constant 0 : i32
    %c0_i32_0 = arith.constant 0 : i32
    %c0_i32_1 = arith.constant 0 : i32
    return %c0_i32, %c0_i32_0 : i32, i32
  }
  func.func @transform_7(%arg0: i32) -> (i32, i32) {
    %c0_i32 = arith.constant 0 : i32
    %c0_i32_0 = arith.constant 0 : i32
    %c0_i32_1 = arith.constant 0 : i32
    return %c0_i32, %c0_i32_0 : i32, i32
  }
  func.func @transform_8(%arg0: i32) -> (i32, i32) {
    %c0_i32 = arith.constant 0 : i32
    %c0_i32_0 = arith.constant 0 : i32
    %c0_i32_1 = arith.constant 0 : i32
    return %c0_i32, %c0_i32_0 : i32, i32
  }
  func.func @transform_9(%arg0: i32) -> (i32, i32) {
    %c0_i32 = arith.constant 0 : i32
    %c0_i32_0 = arith.constant 0 : i32
    return %arg0, %c0_i32 : i32, i32
  }
}

</mosaic_0001>

<llo_original>
// kernel: drag_mlp_forward.1
$region0: #{drag_mlp_forward.1}
  #allocation0 [shape = 'u32[]', space=smem, size = 0x4, offset = 0x4, fixed_abs, tag = 'smem constant byte address 0x4 - core index']
  #allocation1 [shape = 'u32[72,128]{1,0:T(1,128)}', space=vmem, size = 0x9000, scoped, tag = 'internal scratch']
  #allocation2 [shape = 'f32[1,1]{1,0:T(1,128)S(1)}', space=vmem, size = 0x200, scoped, tag = 'scoped memory for drag_mlp_forward.1']
  %s0 = inlined_call_operand.vmem [shape: f32[8,1], index: 0, kind: input, shape index: {}]
  %s1 = inlined_call_operand.vmem [shape: f32[1,128], index: 1, kind: input, shape index: {}]
  %s2 = inlined_call_operand.vmem [shape: f32[1,128], index: 2, kind: input, shape index: {}]
  %s3 = inlined_call_operand.hbm [shape: f32[128,128], index: 3, kind: input, shape index: {}]
  %s4 = inlined_call_operand.vmem [shape: f32[1,128], index: 4, kind: input, shape index: {}]
  %s5 = inlined_call_operand.hbm [shape: f32[128,128], index: 5, kind: input, shape index: {}]
  %s6 = inlined_call_operand.vmem [shape: f32[1,128], index: 6, kind: input, shape index: {}]
  %s7 = inlined_call_operand.vmem [shape: f32[1,128], index: 7, kind: input, shape index: {}]
  %s8 = inlined_call_operand.<no memory space> [shape: f32[1,1], index: 8, kind: input, shape index: {}]
  %s9 = inlined_call_operand.vmem [shape: f32[8,1], index: 9, kind: output, shape index: {}]
  %s10 = sld [smem:[#allocation0]]
  $region54: #{drag_mlp_forward.1} parent=0
    _
  %s12 = ssub.s32 1, %s10
  %s13 = scalar_select 0, %s12, %s10
  %v14 = vstv %s8
  %15 = vst [vmem:[#allocation2] sm:$0x1] %v14
  $region1: #{drag_mlp_forward.1} parent=0
    #allocation3 [shape = 'u8[65536]{0}', space=vmem, size = 0x10000, scoped, tag = 'input window, operand 3, single buffered']
    #allocation4 [shape = 's32[1]{0}', space=sflag, size = 0x4, scoped, tag = 'scoped memory for drag_mlp_forward.1']
    #allocation5 [shape = 'u8[65536]{0}', space=vmem, size = 0x10000, scoped, tag = 'input window, operand 5, single buffered']
    #allocation6 [shape = 's32[1]{0}', space=sflag, size = 0x4, scoped, tag = 'scoped memory for drag_mlp_forward.1']
    %16 = vsyncpa [#allocation4], 0
    %17 = vsyncpa [#allocation6], 0
    // Predicated region
    $region2: #{drag_mlp_forward.1} parent=1 // pred_check
      _
    $region3: #{drag_mlp_forward.1} parent=1 // pred_check_branch
      %19 = sbr.rel (0) target = $region5
    $region4: #{drag_mlp_forward.1} parent=1 // pred_region
      _
    $region5: #{drag_mlp_forward.1} parent=1 // pred_fallthru
      _
    // Predicated region
    $region6: #{drag_mlp_forward.1} parent=1 // pred_check
      _
    $region7: #{drag_mlp_forward.1} parent=1 // pred_check_branch
      %21 = sbr.rel (0) target = $region9
    $region8: #{drag_mlp_forward.1} parent=1 // pred_region
      _
    $region9: #{drag_mlp_forward.1} parent=1 // pred_fallthru
      _
    // Predicated region
    $region10: #{drag_mlp_forward.1} parent=1 // pred_check
      _
    $region11: #{drag_mlp_forward.1} parent=1 // pred_check_branch
      %23 = sbr.rel (0) target = $region13
    $region12: #{drag_mlp_forward.1} parent=1 // pred_region
      _
    $region13: #{drag_mlp_forward.1} parent=1 // pred_fallthru
      _
    // Predicated region
    $region14: #{drag_mlp_forward.1} parent=1 // pred_check
      _
    $region15: #{drag_mlp_forward.1} parent=1 // pred_check_branch
      %25 = sbr.rel (0) target = $region17
    $region16: #{drag_mlp_forward.1} parent=1 // pred_region
      %27 = vsyncadd [#allocation4], 0
      %s28 = sshll.u32 %s3, 4
      %s29 = int_to_ptr.hbm [resolvable:$true] %s28
      %s30 = sshll.u32 [#allocation3], 4
      %s31 = int_to_ptr.vmem [resolvable:$true] %s30
      %36 = dma.hbm_to_vmem [thread:$0]  %s29, 2048, %s31, [#allocation4], 128, 128, 8
    $region17: #{drag_mlp_forward.1} parent=1 // pred_fallthru
      _
    // Predicated region
    $region18: #{drag_mlp_forward.1} parent=1 // pred_check
      _
    $region19: #{drag_mlp_forward.1} parent=1 // pred_check_branch
      %38 = sbr.rel (0) target = $region21
    $region20: #{drag_mlp_forward.1} parent=1 // pred_region
      _
    $region21: #{drag_mlp_forward.1} parent=1 // pred_fallthru
      _
    // Predicated region
    $region22: #{drag_mlp_forward.1} parent=1 // pred_check
      _
    $region23: #{drag_mlp_forward.1} parent=1 // pred_check_branch
      %40 = sbr.rel (0) target = $region25
    $region24: #{drag_mlp_forward.1} parent=1 // pred_region
      %42 = vsyncadd [#allocation6], 0
      %s43 = sshll.u32 %s5, 4
      %s44 = int_to_ptr.hbm [resolvable:$true] %s43
      %s45 = sshll.u32 [#allocation5], 4
      %s46 = int_to_ptr.vmem [resolvable:$true] %s45
      %51 = dma.hbm_to_vmem [thread:$0]  %s44, 2048, %s46, [#allocation6], 128, 128, 8
    $region25: #{drag_mlp_forward.1} parent=1 // pred_fallthru
      _
    // Predicated region
    $region26: #{drag_mlp_forward.1} parent=1 // pred_check
      _
    $region27: #{drag_mlp_forward.1} parent=1 // pred_check_branch
      %53 = sbr.rel (0) target = $region29
    $region28: #{drag_mlp_forward.1} parent=1 // pred_region
      _
    $region29: #{drag_mlp_forward.1} parent=1 // pred_fallthru
      _
    // Predicated region
    $region30: #{drag_mlp_forward.1} parent=1 // pred_check
      _
    $region31: #{drag_mlp_forward.1} parent=1 // pred_check_branch
      %55 = sbr.rel (0) target = $region33
    $region32: #{drag_mlp_forward.1} parent=1 // pred_region
      _
    $region33: #{drag_mlp_forward.1} parent=1 // pred_fallthru
      _
    // Predicated region
    $region34: #{drag_mlp_forward.1} parent=1 // pred_check
      _
    $region35: #{drag_mlp_forward.1} parent=1 // pred_check_branch
      %57 = sbr.rel (0) target = $region37
    $region36: #{drag_mlp_forward.1} parent=1 // pred_region
      _
    $region37: #{drag_mlp_forward.1} parent=1 // pred_fallthru
      _
    // Predicated region
    $region38: #{drag_mlp_forward.1} parent=1 // pred_check
      _
    $region39: #{drag_mlp_forward.1} parent=1 // pred_check_branch
      %59 = sbr.rel (0) target = $region41
    $region40: #{drag_mlp_forward.1} parent=1 // pred_region
      %61 = dma.done [#allocation4], 2048
    $region41: #{drag_mlp_forward.1} parent=1 // pred_fallthru
      _
    // Predicated region
    $region42: #{drag_mlp_forward.1} parent=1 // pred_check
      _
    $region43: #{drag_mlp_forward.1} parent=1 // pred_check_branch
      %63 = sbr.rel (0) target = $region45
    $region44: #{drag_mlp_forward.1} parent=1 // pred_region
      %65 = dma.done [#allocation6], 2048
    $region45: #{drag_mlp_forward.1} parent=1 // pred_fallthru
      _
    %v66 = vld [vmem:[%s0] sm:$0xff]
    %v67 = vld [vmem:[%s1] sm:$0x1]
    %69 = vset.pattern.permute.xlu0 0
    %70 = vperm.xlu0 %69, %v66
    %v71 = vpop.permute.xlu0 %70
    %v74 = vperm.slane %v67, 0
    %v76 = vmul.f32 %v71, %v74
    %v77 = vld [vmem:[%s2] sm:$0x1]
    %v79 = vperm.slane %v77, 0
    %v81 = vadd.f32 %v76, %v79
    %v82 = vmax.f32 %v81, 0.0
    %v83 = vld [vmem:[#allocation3] sm:$0xff]
    %v84 = vld [vmem:[#allocation3 + $0x8] sm:$0xff]
    %v85 = vld [vmem:[#allocation3 + $0x10] sm:$0xff]
    %v86 = vld [vmem:[#allocation3 + $0x18] sm:$0xff]
    %v87 = vld [vmem:[#allocation3 + $0x20] sm:$0xff]
    %v88 = vld [vmem:[#allocation3 + $0x28] sm:$0xff]
    %v89 = vld [vmem:[#allocation3 + $0x30] sm:$0xff]
    %v90 = vld [vmem:[#allocation3 + $0x38] sm:$0xff]
    %v91 = vld [vmem:[#allocation3 + $0x40] sm:$0xff]
    %v92 = vld [vmem:[#allocation3 + $0x48] sm:$0xff]
    %v93 = vld [vmem:[#allocation3 + $0x50] sm:$0xff]
    %v94 = vld [vmem:[#allocation3 + $0x58] sm:$0xff]
    %v95 = vld [vmem:[#allocation3 + $0x60] sm:$0xff]
    %v96 = vld [vmem:[#allocation3 + $0x68] sm:$0xff]
    %v97 = vld [vmem:[#allocation3 + $0x70] sm:$0xff]
    %v98 = vld [vmem:[#allocation3 + $0x78] sm:$0xff]
    %v99 = vld [vmem:[%s4] sm:$0x1]
    %v101 = vperm.slane %v99, 0
    %103 = vmatpush.msra.mxu0 %v98
    %104 = vmatpush.msra.mxu0 %v97
    %105 = vmatpush.msra.mxu0 %v96
    %106 = vmatpush.msra.mxu0 %v95
    %107 = vmatpush.msra.mxu0 %v94
    %108 = vmatpush.msra.mxu0 %v93
    %109 = vmatpush.msra.mxu0 %v92
    %110 = vmatpush.msra.mxu0 %v91
    %111 = vmatpush.msra.mxu0 %v90
    %112 = vmatpush.msra.mxu0 %v89
    %113 = vmatpush.msra.mxu0 %v88
    %114 = vmatpush.msra.mxu0 %v87
    %115 = vmatpush.msra.mxu0 %v86
    %116 = vmatpush.msra.mxu0 %v85
    %117 = vmatpush.msra.mxu0 %v84
    %118 = vmatpush.msra.mxu0 %v83
    %119 = vmatmul.f32.gmra.mxu0 %v82
    %v120 = vpop.f32.mrf.mxu0
    %v121 = vadd.f32 %v101, %v120
    %122 = vdwg.mxu0
    %v123 = vmax.f32 %v121, 0.0
    %v124 = vld [vmem:[#allocation5] sm:$0xff]
    %v125 = vld [vmem:[#allocation5 + $0x8] sm:$0xff]
    %v126 = vld [vmem:[#allocation5 + $0x10] sm:$0xff]
    %v127 = vld [vmem:[#allocation5 + $0x18] sm:$0xff]
    %v128 = vld [vmem:[#allocation5 + $0x20] sm:$0xff]
    %v129 = vld [vmem:[#allocation5 + $0x28] sm:$0xff]
    %v130 = vld [vmem:[#allocation5 + $0x30] sm:$0xff]
    %v131 = vld [vmem:[#allocation5 + $0x38] sm:$0xff]
    %v132 = vld [vmem:[#allocation5 + $0x40] sm:$0xff]
    %v133 = vld [vmem:[#allocation5 + $0x48] sm:$0xff]
    %v134 = vld [vmem:[#allocation5 + $0x50] sm:$0xff]
    %v135 = vld [vmem:[#allocation5 + $0x58] sm:$0xff]
    %v136 = vld [vmem:[#allocation5 + $0x60] sm:$0xff]
    %v137 = vld [vmem:[#allocation5 + $0x68] sm:$0xff]
    %v138 = vld [vmem:[#allocation5 + $0x70] sm:$0xff]
    %v139 = vld [vmem:[#allocation5 + $0x78] sm:$0xff]
    %v140 = vld [vmem:[%s6] sm:$0x1]
    %v142 = vperm.slane %v140, 0
    %144 = vmatpush.msra.mxu0 %v139
    %145 = vmatpush.msra.mxu0 %v138
    %146 = vmatpush.msra.mxu0 %v137
    %147 = vmatpush.msra.mxu0 %v136
    %148 = vmatpush.msra.mxu0 %v135
    %149 = vmatpush.msra.mxu0 %v134
    %150 = vmatpush.msra.mxu0 %v133
    %151 = vmatpush.msra.mxu0 %v132
    %152 = vmatpush.msra.mxu0 %v131
    %153 = vmatpush.msra.mxu0 %v130
    %154 = vmatpush.msra.mxu0 %v129
    %155 = vmatpush.msra.mxu0 %v128
    %156 = vmatpush.msra.mxu0 %v127
    %157 = vmatpush.msra.mxu0 %v126
    %158 = vmatpush.msra.mxu0 %v125
    %159 = vmatpush.msra.mxu0 %v124
    %160 = vmatmul.f32.gmra.mxu0 %v123
    %v161 = vpop.f32.mrf.mxu0
    %v162 = vadd.f32 %v142, %v161
    %163 = vdwg.mxu0
    %v164 = vmax.f32 %v162, 0.0
    %v165 = vld [vmem:[%s7] sm:$0x1]
    %v167 = vperm.slane %v165, 0
    %v169 = vmul.f32 %v164, %v167
    %170 = vadd.xlane.f32.xlu0 %v169
    %v171 = vpop.xlane.xlu0 %170
    %v172 = vld [vmem:[#allocation2] sm:$0x1]
    %v174 = vperm.slane %v172, 0
    %v176 = vadd.f32 %v171, %v174
    %vm177 = vcmask 7168
    %178 = vst.msk [vmem:[%s9] sm:$0xff] %vm177, %v176
    // Predicated region
    $region46: #{drag_mlp_forward.1} parent=1 // pred_check
      _
    $region47: #{drag_mlp_forward.1} parent=1 // pred_check_branch
      %180 = sbr.rel (0) target = $region49
    $region48: #{drag_mlp_forward.1} parent=1 // pred_region
      _
    $region49: #{drag_mlp_forward.1} parent=1 // pred_fallthru
      _
    // Predicated region
    $region50: #{drag_mlp_forward.1} parent=1 // pred_check
      _
    $region51: #{drag_mlp_forward.1} parent=1 // pred_check_branch
      %182 = sbr.rel (0) target = $region53
    $region52: #{drag_mlp_forward.1} parent=1 // pred_region
      _
    $region53: #{drag_mlp_forward.1} parent=1 // pred_fallthru
      _
    %183 = vsyncpa [#allocation4], 1
    %184 = vsyncpa [#allocation6], 1

</llo_original>
